<compile_context>
chip_gen: v6e
topology: v6e:2x2x1
jax: 0.10.0
libtpu: 0.0.40
codegen_flags: <defaults>
</compile_context>

<pallas_src>
import jax
import jax.numpy as jnp
from jax.experimental import pallas as pl
from jax.experimental.pallas import tpu as pltpu

# Module hyper-parameters (from the PyTorch source)
D_MODEL = 284
MAXLEN = 286
N_SEGMENTS = 2
VOCAB_SIZE = 4          # len({'[PAD]','[CLS]','[SEP]','[MASK]'})
LN_EPS = 1e-5

MAX_SEQ_TILE = 1024          # max sequence rows in one tile
MAX_ROWS_PER_STEP = 1024     # target b_tile * tile_s rows per grid step


def _embedding_kernel(ids_ref, pos_ref, tok_tab_ref, seg_tab_ref,
                      gamma_ref, beta_ref, out_ref):
    # ids_ref : (BT, T, 2) int32 — [..., 0] = token id, [..., 1] = segment id
    # pos_ref : (T, D) f32 positional rows, shared by all BT batch rows
    # tok_tab_ref: (4, D); seg_tab_ref: (2, D); gamma/beta: (1, D)
    # out_ref : (BT, T, D) f32
    ids = ids_ref[...]
    tok_id = ids[:, :, 0:1]                       # (BT, T, 1)
    seg_id = ids[:, :, 1:2]                       # (BT, T, 1)

    tok_tab = tok_tab_ref[...]                    # (4, D)
    seg_tab = seg_tab_ref[...]                    # (2, D)

    # Tiny-vocab gathers as nested VPU selects (no MXU, minimal VALU passes).
    tok = jnp.where(
        tok_id == 0, tok_tab[0:1, :],
        jnp.where(tok_id == 1, tok_tab[1:2, :],
                  jnp.where(tok_id == 2, tok_tab[2:3, :], tok_tab[3:4, :])))
    seg = jnp.where(seg_id == 0, seg_tab[0:1, :], seg_tab[1:2, :])

    emb = pos_ref[...][None, :, :] + tok + seg    # (BT, T, D)

    # LayerNorm over the feature axis (exactly nn.LayerNorm(d_model)).
    mean = jnp.mean(emb, axis=-1, keepdims=True)
    centered = emb - mean
    var = jnp.mean(centered * centered, axis=-1, keepdims=True)
    inv = jax.lax.rsqrt(var + LN_EPS)
    out_ref[...] = centered * inv * gamma_ref[...] + beta_ref[...]


def _choose_seq_tile(s_pad, max_tile=MAX_SEQ_TILE):
    """Largest multiple of 8 that is <= max_tile and divides s_pad."""
    t = min(max_tile, s_pad)
    t -= t % 8
    t = max(t, 8)
    while s_pad % t != 0:
        t -= 8
    return t


def _choose_batch_tile(b, tile_s, row_budget=MAX_ROWS_PER_STEP):
    """Largest divisor of b with b_tile * tile_s <= row_budget (>= 1)."""
    best = 1
    for cand in range(1, b + 1):
        if b % cand == 0 and cand * tile_s <= row_budget:
            best = cand
    return best


def embedding_forward(x, seg, tok_table, pos_table, seg_table, gamma, beta):
    """x, seg: [B, S] int.  Returns [B, S, D_MODEL] float32."""
    B, S = x.shape

    # Pad sequence length up to a multiple of 8 so all blocks are full.
    S_pad = pl.cdiv(S, 8) * 8
    tile_s = _choose_seq_tile(S_pad)
    b_tile = _choose_batch_tile(B, tile_s)

    x = x.astype(jnp.int32)
    seg = seg.astype(jnp.int32)
    if S_pad != S:
        pad = ((0, 0), (0, S_pad - S))
        x = jnp.pad(x, pad)       # id 0 ('[PAD]') — padded rows are sliced off
        seg = jnp.pad(seg, pad)

    # Pack token + segment ids into one (B, S_pad, 2) stream (one DMA / block).
    ids = jnp.stack([x, seg], axis=-1)

    # Positional rows: exactly S_pad rows so every (tile_s, D) block is full.
    pos_table = pos_table.astype(jnp.float32)
    if S_pad <= pos_table.shape[0]:
        pos_rows = pos_table[:S_pad]
    else:
        pos_rows = jnp.pad(pos_table, ((0, S_pad - pos_table.shape[0]), (0, 0)))

    gamma2 = gamma.reshape(1, D_MODEL).astype(jnp.float32)
    beta2 = beta.reshape(1, D_MODEL).astype(jnp.float32)

    # Sequence-tile axis outermost: the pos slab's block index is constant
    # across the inner batch loop, so the pipeliner skips redundant pos copies.
    grid = (S_pad // tile_s, B // b_tile)

    out = pl.pallas_call(
        _embedding_kernel,
        out_shape=jax.ShapeDtypeStruct((B, S_pad, D_MODEL), jnp.float32),
        grid=grid,
        in_specs=[
            pl.BlockSpec((b_tile, tile_s, 2), lambda j, b: (b, j, 0)),      # packed ids
            pl.BlockSpec((tile_s, D_MODEL), lambda j, b: (j, 0)),           # pos rows
            pl.BlockSpec((VOCAB_SIZE, D_MODEL), lambda j, b: (0, 0)),       # tok table
            pl.BlockSpec((N_SEGMENTS, D_MODEL), lambda j, b: (0, 0)),       # seg table
            pl.BlockSpec((1, D_MODEL), lambda j, b: (0, 0)),                # LN gamma
            pl.BlockSpec((1, D_MODEL), lambda j, b: (0, 0)),                # LN beta
        ],
        out_specs=pl.BlockSpec((b_tile, tile_s, D_MODEL), lambda j, b: (b, j, 0)),
        compiler_params=pltpu.CompilerParams(
            dimension_semantics=("parallel", "parallel"),
            vmem_limit_bytes=32 * 1024 * 1024),
    )(ids, pos_rows,
      tok_table.astype(jnp.float32), seg_table.astype(jnp.float32),
      gamma2, beta2)

    if S_pad != S:
        out = out[:, :S, :]
    return out


def _reference(x, seg, tok_table, pos_table, seg_table, gamma, beta):
    B, S = x.shape
    pos = jnp.broadcast_to(jnp.arange(S, dtype=jnp.int32)[None, :], (B, S))
    emb = tok_table[x] + pos_table[pos] + seg_table[seg]
    mean = emb.mean(-1, keepdims=True)
    var = ((emb - mean) ** 2).mean(-1, keepdims=True)
    return (emb - mean) * jax.lax.rsqrt(var + LN_EPS) * gamma + beta


if __name__ == "__main__":
    key = jax.random.PRNGKey(0)
    k_tok, k_pos, k_seg, k_x, k_s = jax.random.split(key, 5)

    # Deterministic parameter init (nn.Embedding default ~ N(0,1); LN: 1 / 0).
    tok_table = jax.random.normal(k_tok, (VOCAB_SIZE, D_MODEL), jnp.float32)
    pos_table = jax.random.normal(k_pos, (MAXLEN, D_MODEL), jnp.float32)
    seg_table = jax.random.normal(k_seg, (N_SEGMENTS, D_MODEL), jnp.float32)
    gamma = jnp.ones((D_MODEL,), jnp.float32)
    beta = jnp.zeros((D_MODEL,), jnp.float32)

    ok = True

    # Test 1: small example, batch=2, seq=8 (seq divisible by 8).
    B, S = 2, 8
    x = jax.random.randint(k_x, (B, S), 0, VOCAB_SIZE, dtype=jnp.int32)
    seg = jax.random.randint(k_s, (B, S), 0, N_SEGMENTS, dtype=jnp.int32)
    out = embedding_forward(x, seg, tok_table, pos_table, seg_table, gamma, beta)
    out = jax.block_until_ready(out)
    ref = _reference(x, seg, tok_table, pos_table, seg_table, gamma, beta)
    ok &= out.shape == (B, S, D_MODEL)
    ok &= bool(jnp.allclose(out, ref, atol=1e-4, rtol=1e-4))

    # Test 2: seq not a multiple of 8 (exercises the padding / slicing path).
    B2, S2 = 2, 13
    x2 = jax.random.randint(jax.random.fold_in(k_x, 1), (B2, S2), 0,
                            VOCAB_SIZE, dtype=jnp.int32)
    seg2 = jax.random.randint(jax.random.fold_in(k_s, 1), (B2, S2), 0,
                              N_SEGMENTS, dtype=jnp.int32)
    out2 = embedding_forward(x2, seg2, tok_table, pos_table, seg_table, gamma, beta)
    out2 = jax.block_until_ready(out2)
    ref2 = _reference(x2, seg2, tok_table, pos_table, seg_table, gamma, beta)
    ok &= out2.shape == (B2, S2, D_MODEL)
    ok &= bool(jnp.allclose(out2, ref2, atol=1e-4, rtol=1e-4))

    # Test 3: batch tiling path with a multi-step grid along the batch axis.
    B3, S3 = 8, 136
    x3 = jax.random.randint(jax.random.fold_in(k_x, 2), (B3, S3), 0,
                            VOCAB_SIZE, dtype=jnp.int32)
    seg3 = jax.random.randint(jax.random.fold_in(k_s, 2), (B3, S3), 0,
                              N_SEGMENTS, dtype=jnp.int32)
    out3 = embedding_forward(x3, seg3, tok_table, pos_table, seg_table, gamma, beta)
    out3 = jax.block_until_ready(out3)
    ref3 = _reference(x3, seg3, tok_table, pos_table, seg_table, gamma, beta)
    ok &= out3.shape == (B3, S3, D_MODEL)
    ok &= bool(jnp.allclose(out3, ref3, atol=1e-4, rtol=1e-4))

    assert ok
    print("KERNEL_OK")
</pallas_src>

<mosaic_0001>
module attributes {stable_mosaic.version = 11 : i64} {
  func.func @_embedding_kernel(%arg0: i32, %arg1: i32, %arg2: memref<2x8x2xi32, #tpu.memory_space<vmem>>, %arg3: memref<8x284xf32, #tpu.memory_space<vmem>>, %arg4: memref<4x284xf32, #tpu.memory_space<vmem>>, %arg5: memref<2x284xf32, #tpu.memory_space<vmem>>, %arg6: memref<1x284xf32, #tpu.memory_space<vmem>>, %arg7: memref<1x284xf32, #tpu.memory_space<vmem>>, %arg8: memref<2x8x284xf32, #tpu.memory_space<vmem>>) attributes {dimension_semantics = [#tpu.dimension_semantics<parallel>, #tpu.dimension_semantics<parallel>], iteration_bounds = array<i64: 1, 1>, scalar_prefetch = 0 : i64, scratch_operands = 0 : i64, tpu.core_type = #tpu.core_type<tc>, window_params = [{transform_indices = @transform_0, window_bounds = array<i64: 2, 8, 2>}, {transform_indices = @transform_1, window_bounds = array<i64: 8, 284>}, {pipeline_mode = #tpu.pipeline_mode<synchronous>, transform_indices = @transform_2, window_bounds = array<i64: 4, 284>}, {pipeline_mode = #tpu.pipeline_mode<synchronous>, transform_indices = @transform_3, window_bounds = array<i64: 2, 284>}, {pipeline_mode = #tpu.pipeline_mode<synchronous>, transform_indices = @transform_4, window_bounds = array<i64: 1, 284>}, {pipeline_mode = #tpu.pipeline_mode<synchronous>, transform_indices = @transform_5, window_bounds = array<i64: 1, 284>}, {transform_indices = @transform_6, window_bounds = array<i64: 2, 8, 284>}]} {
    %c0 = arith.constant 0 : index
    %c0_0 = arith.constant 0 : index
    %c0_1 = arith.constant 0 : index
    %0 = vector.load %arg2[%c0, %c0_0, %c0_1] : memref<2x8x2xi32, #tpu.memory_space<vmem>>, vector<2x8x2xi32>
    %1 = vector.extract_strided_slice %0 {offsets = [0, 0, 0], sizes = [2, 8, 1], strides = [1, 1, 1]} : vector<2x8x2xi32> to vector<2x8x1xi32>
    %2 = vector.extract_strided_slice %0 {offsets = [0, 0, 1], sizes = [2, 8, 1], strides = [1, 1, 1]} : vector<2x8x2xi32> to vector<2x8x1xi32>
    %c0_2 = arith.constant 0 : index
    %c0_3 = arith.constant 0 : index
    %3 = vector.load %arg4[%c0_2, %c0_3] : memref<4x284xf32, #tpu.memory_space<vmem>>, vector<4x284xf32>
    %c0_4 = arith.constant 0 : index
    %c0_5 = arith.constant 0 : index
    %4 = vector.load %arg5[%c0_4, %c0_5] : memref<2x284xf32, #tpu.memory_space<vmem>>, vector<2x284xf32>
    %c0_i32 = arith.constant 0 : i32
    %5 = vector.broadcast %c0_i32 : i32 to vector<2x8x1xi32>
    %6 = arith.cmpi eq, %1, %5 : vector<2x8x1xi32>
    %7 = vector.extract_strided_slice %3 {offsets = [0, 0], sizes = [1, 284], strides = [1, 1]} : vector<4x284xf32> to vector<1x284xf32>
    %c1_i32 = arith.constant 1 : i32
    %8 = vector.broadcast %c1_i32 : i32 to vector<2x8x1xi32>
    %9 = arith.cmpi eq, %1, %8 : vector<2x8x1xi32>
    %10 = vector.extract_strided_slice %3 {offsets = [1, 0], sizes = [1, 284], strides = [1, 1]} : vector<4x284xf32> to vector<1x284xf32>
    %c2_i32 = arith.constant 2 : i32
    %11 = vector.broadcast %c2_i32 : i32 to vector<2x8x1xi32>
    %12 = arith.cmpi eq, %1, %11 : vector<2x8x1xi32>
    %13 = vector.extract_strided_slice %3 {offsets = [2, 0], sizes = [1, 284], strides = [1, 1]} : vector<4x284xf32> to vector<1x284xf32>
    %14 = vector.extract_strided_slice %3 {offsets = [3, 0], sizes = [1, 284], strides = [1, 1]} : vector<4x284xf32> to vector<1x284xf32>
    %15 = vector.shape_cast %12 : vector<2x8x1xi1> to vector<2x8x1xi1>
    %16 = vector.broadcast %15 : vector<2x8x1xi1> to vector<2x8x284xi1>
    %17 = vector.shape_cast %13 : vector<1x284xf32> to vector<1x1x284xf32>
    %18 = vector.broadcast %17 : vector<1x1x284xf32> to vector<2x8x284xf32>
    %19 = vector.shape_cast %14 : vector<1x284xf32> to vector<1x1x284xf32>
    %20 = vector.broadcast %19 : vector<1x1x284xf32> to vector<2x8x284xf32>
    %21 = arith.select %16, %18, %20 : vector<2x8x284xi1>, vector<2x8x284xf32>
    %22 = vector.shape_cast %9 : vector<2x8x1xi1> to vector<2x8x1xi1>
    %23 = vector.broadcast %22 : vector<2x8x1xi1> to vector<2x8x284xi1>
    %24 = vector.shape_cast %10 : vector<1x284xf32> to vector<1x1x284xf32>
    %25 = vector.broadcast %24 : vector<1x1x284xf32> to vector<2x8x284xf32>
    %26 = arith.select %23, %25, %21 : vector<2x8x284xi1>, vector<2x8x284xf32>
    %27 = vector.shape_cast %6 : vector<2x8x1xi1> to vector<2x8x1xi1>
    %28 = vector.broadcast %27 : vector<2x8x1xi1> to vector<2x8x284xi1>
    %29 = vector.shape_cast %7 : vector<1x284xf32> to vector<1x1x284xf32>
    %30 = vector.broadcast %29 : vector<1x1x284xf32> to vector<2x8x284xf32>
    %31 = arith.select %28, %30, %26 : vector<2x8x284xi1>, vector<2x8x284xf32>
    %c0_i32_6 = arith.constant 0 : i32
    %32 = vector.broadcast %c0_i32_6 : i32 to vector<2x8x1xi32>
    %33 = arith.cmpi eq, %2, %32 : vector<2x8x1xi32>
    %34 = vector.extract_strided_slice %4 {offsets = [0, 0], sizes = [1, 284], strides = [1, 1]} : vector<2x284xf32> to vector<1x284xf32>
    %35 = vector.extract_strided_slice %4 {offsets = [1, 0], sizes = [1, 284], strides = [1, 1]} : vector<2x284xf32> to vector<1x284xf32>
    %36 = vector.shape_cast %33 : vector<2x8x1xi1> to vector<2x8x1xi1>
    %37 = vector.broadcast %36 : vector<2x8x1xi1> to vector<2x8x284xi1>
    %38 = vector.shape_cast %34 : vector<1x284xf32> to vector<1x1x284xf32>
    %39 = vector.broadcast %38 : vector<1x1x284xf32> to vector<2x8x284xf32>
    %40 = vector.shape_cast %35 : vector<1x284xf32> to vector<1x1x284xf32>
    %41 = vector.broadcast %40 : vector<1x1x284xf32> to vector<2x8x284xf32>
    %42 = arith.select %37, %39, %41 : vector<2x8x284xi1>, vector<2x8x284xf32>
    %c0_7 = arith.constant 0 : index
    %c0_8 = arith.constant 0 : index
    %43 = vector.load %arg3[%c0_7, %c0_8] : memref<8x284xf32, #tpu.memory_space<vmem>>, vector<8x284xf32>
    %44 = vector.shape_cast %43 : vector<8x284xf32> to vector<1x8x284xf32>
    %45 = vector.broadcast %44 : vector<1x8x284xf32> to vector<2x8x284xf32>
    %46 = arith.addf %45, %31 : vector<2x8x284xf32>
    %47 = arith.addf %46, %42 : vector<2x8x284xf32>
    %cst = arith.constant dense<0.000000e+00> : vector<2x8xf32>
    %48 = vector.multi_reduction <add>, %47, %cst [2] : vector<2x8x284xf32> to vector<2x8xf32>
    %49 = vector.shape_cast %48 : vector<2x8xf32> to vector<2x8x1xf32>
    %cst_9 = arith.constant 2.840000e+02 : f32
    %50 = vector.broadcast %cst_9 : f32 to vector<2x8x1xf32>
    %51 = arith.divf %49, %50 : vector<2x8x1xf32>
    %52 = vector.broadcast %51 : vector<2x8x1xf32> to vector<2x8x284xf32>
    %53 = arith.subf %47, %52 : vector<2x8x284xf32>
    %54 = arith.mulf %53, %53 : vector<2x8x284xf32>
    %cst_10 = arith.constant dense<0.000000e+00> : vector<2x8xf32>
    %55 = vector.multi_reduction <add>, %54, %cst_10 [2] : vector<2x8x284xf32> to vector<2x8xf32>
    %56 = vector.shape_cast %55 : vector<2x8xf32> to vector<2x8x1xf32>
    %cst_11 = arith.constant 2.840000e+02 : f32
    %57 = vector.broadcast %cst_11 : f32 to vector<2x8x1xf32>
    %58 = arith.divf %56, %57 : vector<2x8x1xf32>
    %cst_12 = arith.constant 9.99999974E-6 : f32
    %59 = vector.broadcast %cst_12 : f32 to vector<2x8x1xf32>
    %60 = arith.addf %58, %59 : vector<2x8x1xf32>
    %61 = math.rsqrt %60 : vector<2x8x1xf32>
    %62 = vector.broadcast %61 : vector<2x8x1xf32> to vector<2x8x284xf32>
    %63 = arith.mulf %53, %62 : vector<2x8x284xf32>
    %c0_13 = arith.constant 0 : index
    %c0_14 = arith.constant 0 : index
    %64 = vector.load %arg6[%c0_13, %c0_14] : memref<1x284xf32, #tpu.memory_space<vmem>>, vector<1x284xf32>
    %65 = vector.shape_cast %64 : vector<1x284xf32> to vector<1x1x284xf32>
    %66 = vector.broadcast %65 : vector<1x1x284xf32> to vector<2x8x284xf32>
    %67 = arith.mulf %63, %66 : vector<2x8x284xf32>
    %c0_15 = arith.constant 0 : index
    %c0_16 = arith.constant 0 : index
    %68 = vector.load %arg7[%c0_15, %c0_16] : memref<1x284xf32, #tpu.memory_space<vmem>>, vector<1x284xf32>
    %69 = vector.shape_cast %68 : vector<1x284xf32> to vector<1x1x284xf32>
    %70 = vector.broadcast %69 : vector<1x1x284xf32> to vector<2x8x284xf32>
    %71 = arith.addf %67, %70 : vector<2x8x284xf32>
    %c0_17 = arith.constant 0 : index
    %c0_18 = arith.constant 0 : index
    %c0_19 = arith.constant 0 : index
    %72 = vector.load %arg8[%c0_17, %c0_18, %c0_19] : memref<2x8x284xf32, #tpu.memory_space<vmem>>, vector<2x8x284xf32>
    tpu.vector_store %arg8[%c0_17, %c0_18, %c0_19], %71 {strides = array<i32>} : memref<2x8x284xf32, #tpu.memory_space<vmem>>, vector<2x8x284xf32>,
    return
  }
  func.func @transform_0(%arg0: i32, %arg1: i32) -> (i32, i32, i32) {
    %c0_i32 = arith.constant 0 : i32
    %c0_i32_0 = arith.constant 0 : i32
    return %arg1, %arg0, %c0_i32 : i32, i32, i32
  }
  func.func @transform_1(%arg0: i32, %arg1: i32) -> (i32, i32) {
    %c0_i32 = arith.constant 0 : i32
    %c0_i32_0 = arith.constant 0 : i32
    return %arg0, %c0_i32 : i32, i32
  }
  func.func @transform_2(%arg0: i32, %arg1: i32) -> (i32, i32) {
    %c0_i32 = arith.constant 0 : i32
    %c0_i32_0 = arith.constant 0 : i32
    %c0_i32_1 = arith.constant 0 : i32
    return %c0_i32, %c0_i32_0 : i32, i32
  }
  func.func @transform_3(%arg0: i32, %arg1: i32) -> (i32, i32) {
    %c0_i32 = arith.constant 0 : i32
    %c0_i32_0 = arith.constant 0 : i32
    %c0_i32_1 = arith.constant 0 : i32
    return %c0_i32, %c0_i32_0 : i32, i32
  }
  func.func @transform_4(%arg0: i32, %arg1: i32) -> (i32, i32) {
    %c0_i32 = arith.constant 0 : i32
    %c0_i32_0 = arith.constant 0 : i32
    %c0_i32_1 = arith.constant 0 : i32
    return %c0_i32, %c0_i32_0 : i32, i32
  }
  func.func @transform_5(%arg0: i32, %arg1: i32) -> (i32, i32) {
    %c0_i32 = arith.constant 0 : i32
    %c0_i32_0 = arith.constant 0 : i32
    %c0_i32_1 = arith.constant 0 : i32
    return %c0_i32, %c0_i32_0 : i32, i32
  }
  func.func @transform_6(%arg0: i32, %arg1: i32) -> (i32, i32, i32) {
    %c0_i32 = arith.constant 0 : i32
    %c0_i32_0 = arith.constant 0 : i32
    return %arg1, %arg0, %c0_i32 : i32, i32, i32
  }
}

</mosaic_0001>

<llo_original>
// kernel: tpu_custom_call.1
$region0: #{tpu_custom_call.1}
  #allocation0 [shape = 'u32[]', space=smem, size = 0x4, offset = 0x4, fixed_abs, tag = 'smem constant byte address 0x4 - core index']
  #allocation1 [shape = 'u32[144,128]{1,0:T(1,128)}', space=vmem, size = 0x12000, scoped, tag = 'internal scratch']
  %s0 = inlined_call_operand.vmem [shape: s32[2,8,2], index: 0, kind: input, shape index: {}]
  %s1 = inlined_call_operand.hbm [shape: f32[8,284], index: 1, kind: input, shape index: {}]
  %s2 = inlined_call_operand.vmem [shape: f32[4,284], index: 2, kind: input, shape index: {}]
  %s3 = inlined_call_operand.vmem [shape: f32[2,284], index: 3, kind: input, shape index: {}]
  %s4 = inlined_call_operand.vmem [shape: f32[1,284], index: 4, kind: input, shape index: {}]
  %s5 = inlined_call_operand.vmem [shape: f32[1,284], index: 5, kind: input, shape index: {}]
  %s6 = inlined_call_operand.hbm [shape: f32[2,8,284], index: 6, kind: output, shape index: {}]
  %s7 = sld [smem:[#allocation0]]
  $region38: #{tpu_custom_call.1} parent=0
    _
  %s9 = ssub.s32 1, %s7
  %s10 = scalar_select 0, %s9, %s7
  $region1: #{tpu_custom_call.1} parent=0
    #allocation2 [shape = 'u8[12288]{0}', space=vmem, size = 0x3000, scoped, tag = 'input window, operand 1, single buffered']
    #allocation3 [shape = 's32[1]{0}', space=sflag, size = 0x4, scoped, tag = 'scoped memory for tpu_custom_call.1']
    #allocation4 [shape = 's32[1]{0}', space=sflag, size = 0x4, scoped, tag = 'scoped memory for tpu_custom_call.1']
    #allocation5 [shape = 'u8[24576]{0}', space=vmem, size = 0x6000, scoped, tag = 'output window, operand 0, single buffered']
    %11 = vsyncpa [#allocation3], 0
    %12 = vsyncpa [#allocation4], 0
    // Predicated region
    $region2: #{tpu_custom_call.1} parent=1 // pred_check
      _
    $region3: #{tpu_custom_call.1} parent=1 // pred_check_branch
      %14 = sbr.rel (0) target = $region5
    $region4: #{tpu_custom_call.1} parent=1 // pred_region
      _
    $region5: #{tpu_custom_call.1} parent=1 // pred_fallthru
      _
    // Predicated region
    $region6: #{tpu_custom_call.1} parent=1 // pred_check
      _
    $region7: #{tpu_custom_call.1} parent=1 // pred_check_branch
      %16 = sbr.rel (0) target = $region9
    $region8: #{tpu_custom_call.1} parent=1 // pred_region
      %s18 = ssub.s32 384, 384
      %19 = vsyncadd [#allocation3], %s18
      %s21 = sshll.u32 [#allocation2], 4
      %s22 = int_to_ptr.vmem [resolvable:$true] %s21
      %24 = dma.hbm_to_vmem [thread:$0]  %s1, 384, %s22, [#allocation3]
    $region9: #{tpu_custom_call.1} parent=1 // pred_fallthru
      _
    // Predicated region
    $region10: #{tpu_custom_call.1} parent=1 // pred_check
      _
    $region11: #{tpu_custom_call.1} parent=1 // pred_check_branch
      %26 = sbr.rel (0) target = $region13
    $region12: #{tpu_custom_call.1} parent=1 // pred_region
      _
    $region13: #{tpu_custom_call.1} parent=1 // pred_fallthru
      _
    // Predicated region
    $region14: #{tpu_custom_call.1} parent=1 // pred_check
      _
    $region15: #{tpu_custom_call.1} parent=1 // pred_check_branch
      %28 = sbr.rel (0) target = $region17
    $region16: #{tpu_custom_call.1} parent=1 // pred_region
      _
    $region17: #{tpu_custom_call.1} parent=1 // pred_fallthru
      _
    // Predicated region
    $region18: #{tpu_custom_call.1} parent=1 // pred_check
      _
    $region19: #{tpu_custom_call.1} parent=1 // pred_check_branch
      %30 = sbr.rel (0) target = $region21
    $region20: #{tpu_custom_call.1} parent=1 // pred_region
      _
    $region21: #{tpu_custom_call.1} parent=1 // pred_fallthru
      _
    // Predicated region
    $region22: #{tpu_custom_call.1} parent=1 // pred_check
      _
    $region23: #{tpu_custom_call.1} parent=1 // pred_check_branch
      %32 = sbr.rel (0) target = $region25
    $region24: #{tpu_custom_call.1} parent=1 // pred_region
      _
    $region25: #{tpu_custom_call.1} parent=1 // pred_fallthru
      _
    // Predicated region
    $region26: #{tpu_custom_call.1} parent=1 // pred_check
      _
    $region27: #{tpu_custom_call.1} parent=1 // pred_check_branch
      %34 = sbr.rel (0) target = $region29
    $region28: #{tpu_custom_call.1} parent=1 // pred_region
      %35 = dma.done [#allocation3], 384
    $region29: #{tpu_custom_call.1} parent=1 // pred_fallthru
      _
    %v36 = vld [vmem:[%s0] sm:$0xff]
    %v37 = vld [vmem:[%s0 + $0x8] sm:$0xff]
    %v38 = vld [vmem:[%s2] sm:$0xff]
    %v39 = vld [vmem:[%s2 + $0x8] sm:$0xf]
    %v40 = vld [vmem:[%s3] sm:$0x3f]
    %vm41 = vcmp.eq.s32.totalorder %v36, 0
    %vm42 = vcmp.eq.s32.totalorder %v37, 0
    %vm43 = vcmp.eq.s32.totalorder %v36, 1
    %vm44 = vcmp.eq.s32.totalorder %v37, 1
    %vm45 = vcmp.eq.s32.totalorder %v36, 2
    %vm46 = vcmp.eq.s32.totalorder %v37, 2
    %v47 = vsel %vm45, 1, 0
    %v48 = vsel %vm46, 1, 0
    %49 = vset.pattern.permute.xlu0 0
    %50 = vperm.xlu0 %49, %v47
    %v51 = vpop.permute.xlu0 %50
    %52 = vset.pattern.permute.xlu0 0
    %53 = vperm.xlu0 %52, %v48
    %v54 = vpop.permute.xlu0 %53
    %vm55 = vcmp.eq.s32.totalorder %v51, 1
    %vm56 = vcmp.eq.s32.totalorder %v54, 1
    %v59 = vlaneseq
    %v60 = vshrl.u32 %v59, 7
    %v61 = vsub.s32 2, %v60
    %v62 = vrot.slane %v38, %v61
    %v63 = vlaneseq
    %v64 = vshrl.u32 %v63, 7
    %v65 = vsub.s32 6, %v64
    %v66 = vrot.slane %v38, %v65
    %v67 = vlaneseq
    %v68 = vshrl.u32 %v67, 7
    %v69 = vsub.s32 2, %v68
    %v70 = vrot.slane %v39, %v69
    %v74 = vlaneseq
    %v75 = vshrl.u32 %v74, 7
    %v76 = vsub.s32 2, %v75
    %v77 = vrot.slane %v62, %v76
    %v78 = vlaneseq
    %v79 = vshrl.u32 %v78, 7
    %v80 = vsub.s32 2, %v79
    %v81 = vrot.slane %v66, %v80
    %v82 = vlaneseq
    %v83 = vshrl.u32 %v82, 7
    %v84 = vsub.s32 2, %v83
    %v85 = vrot.slane %v70, %v84
    %v86 = vlaneseq
    %v87 = vshrl.u32 %v86, 7
    %v88 = vsub.s32 3, %v87
    %v89 = vrot.slane %v38, %v88
    %v90 = vlaneseq
    %v91 = vshrl.u32 %v90, 7
    %v92 = vsub.s32 7, %v91
    %v93 = vrot.slane %v38, %v92
    %v94 = vlaneseq
    %v95 = vshrl.u32 %v94, 7
    %v96 = vsub.s32 3, %v95
    %v97 = vrot.slane %v39, %v96
    %v101 = vlaneseq
    %v102 = vshrl.u32 %v101, 7
    %v103 = vsub.s32 3, %v102
    %v104 = vrot.slane %v89, %v103
    %v105 = vlaneseq
    %v106 = vshrl.u32 %v105, 7
    %v107 = vsub.s32 3, %v106
    %v108 = vrot.slane %v93, %v107
    %v109 = vlaneseq
    %v110 = vshrl.u32 %v109, 7
    %v111 = vsub.s32 3, %v110
    %v112 = vrot.slane %v97, %v111
    %v113 = vsel %vm55, %v77, %v104
    %v114 = vsel %vm55, %v81, %v108
    %v115 = vsel %vm55, %v85, %v112
    %v116 = vsel %vm56, %v77, %v104
    %v117 = vsel %vm56, %v81, %v108
    %v118 = vsel %vm56, %v85, %v112
    %v119 = vsel %vm43, 1, 0
    %v120 = vsel %vm44, 1, 0
    %121 = vset.pattern.permute.xlu0 0
    %122 = vperm.xlu0 %121, %v119
    %v123 = vpop.permute.xlu0 %122
    %124 = vset.pattern.permute.xlu0 0
    %125 = vperm.xlu0 %124, %v120
    %v126 = vpop.permute.xlu0 %125
    %vm127 = vcmp.eq.s32.totalorder %v123, 1
    %vm128 = vcmp.eq.s32.totalorder %v126, 1
    %v129 = vlaneseq
    %v130 = vshrl.u32 %v129, 7
    %v131 = vsub.s32 1, %v130
    %v132 = vrot.slane %v38, %v131
    %v133 = vlaneseq
    %v134 = vshrl.u32 %v133, 7
    %v135 = vsub.s32 5, %v134
    %v136 = vrot.slane %v38, %v135
    %v137 = vlaneseq
    %v138 = vshrl.u32 %v137, 7
    %v139 = vsub.s32 1, %v138
    %v140 = vrot.slane %v39, %v139
    %v144 = vlaneseq
    %v145 = vshrl.u32 %v144, 7
    %v146 = vsub.s32 1, %v145
    %v147 = vrot.slane %v132, %v146
    %v148 = vlaneseq
    %v149 = vshrl.u32 %v148, 7
    %v150 = vsub.s32 1, %v149
    %v151 = vrot.slane %v136, %v150
    %v152 = vlaneseq
    %v153 = vshrl.u32 %v152, 7
    %v154 = vsub.s32 1, %v153
    %v155 = vrot.slane %v140, %v154
    %v156 = vsel %vm127, %v147, %v113
    %v157 = vsel %vm127, %v151, %v114
    %v158 = vsel %vm127, %v155, %v115
    %v159 = vsel %vm128, %v147, %v116
    %v160 = vsel %vm128, %v151, %v117
    %v161 = vsel %vm128, %v155, %v118
    %v162 = vsel %vm41, 1, 0
    %v163 = vsel %vm42, 1, 0
    %164 = vset.pattern.permute.xlu0 0
    %165 = vperm.xlu0 %164, %v162
    %v166 = vpop.permute.xlu0 %165
    %167 = vset.pattern.permute.xlu0 0
    %168 = vperm.xlu0 %167, %v163
    %v169 = vpop.permute.xlu0 %168
    %vm170 = vcmp.eq.s32.totalorder %v166, 1
    %vm171 = vcmp.eq.s32.totalorder %v169, 1
    %v172 = vlaneseq
    %v173 = vshrl.u32 %v172, 7
    %v174 = vsub.s32 0, %v173
    %v175 = vrot.slane %v38, %v174
    %v176 = vlaneseq
    %v177 = vshrl.u32 %v176, 7
    %v178 = vsub.s32 4, %v177
    %v179 = vrot.slane %v38, %v178
    %v180 = vlaneseq
    %v181 = vshrl.u32 %v180, 7
    %v182 = vsub.s32 0, %v181
    %v183 = vrot.slane %v39, %v182
    %v187 = vlaneseq
    %v188 = vshrl.u32 %v187, 7
    %v189 = vsub.s32 0, %v188
    %v190 = vrot.slane %v175, %v189
    %v191 = vlaneseq
    %v192 = vshrl.u32 %v191, 7
    %v193 = vsub.s32 0, %v192
    %v194 = vrot.slane %v179, %v193
    %v195 = vlaneseq
    %v196 = vshrl.u32 %v195, 7
    %v197 = vsub.s32 0, %v196
    %v198 = vrot.slane %v183, %v197
    %v199 = vsel %vm170, %v190, %v156
    %v200 = vsel %vm170, %v194, %v157
    %v201 = vsel %vm170, %v198, %v158
    %v202 = vsel %vm171, %v190, %v159
    %v203 = vsel %vm171, %v194, %v160
    %v204 = vsel %vm171, %v198, %v161
    %205 = vset.pattern.permute.xlu0 1
    %206 = vperm.xlu0 %205, %v162
    %v207 = vpop.permute.xlu0 %206
    %208 = vset.pattern.permute.xlu0 1
    %209 = vperm.xlu0 %208, %v163
    %v210 = vpop.permute.xlu0 %209
    %vm211 = vcmp.eq.s32.totalorder %v207, 1
    %vm212 = vcmp.eq.s32.totalorder %v210, 1
    %v214 = vlaneseq
    %v215 = vshrl.u32 %v214, 7
    %v216 = vsub.s32 0, %v215
    %v217 = vrot.slane %v40, %v216
    %v218 = vlaneseq
    %v219 = vshrl.u32 %v218, 7
    %v220 = vsub.s32 2, %v219
    %v221 = vrot.slane %v40, %v220
    %v222 = vlaneseq
    %v223 = vshrl.u32 %v222, 7
    %v224 = vsub.s32 4, %v223
    %v225 = vrot.slane %v40, %v224
    %v229 = vlaneseq
    %v230 = vshrl.u32 %v229, 7
    %v231 = vsub.s32 0, %v230
    %v232 = vrot.slane %v217, %v231
    %v233 = vlaneseq
    %v234 = vshrl.u32 %v233, 7
    %v235 = vsub.s32 0, %v234
    %v236 = vrot.slane %v221, %v235
    %v237 = vlaneseq
    %v238 = vshrl.u32 %v237, 7
    %v239 = vsub.s32 0, %v238
    %v240 = vrot.slane %v225, %v239
    %v241 = vlaneseq
    %v242 = vshrl.u32 %v241, 7
    %v243 = vsub.s32 1, %v242
    %v244 = vrot.slane %v40, %v243
    %v245 = vlaneseq
    %v246 = vshrl.u32 %v245, 7
    %v247 = vsub.s32 3, %v246
    %v248 = vrot.slane %v40, %v247
    %v249 = vlaneseq
    %v250 = vshrl.u32 %v249, 7
    %v251 = vsub.s32 5, %v250
    %v252 = vrot.slane %v40, %v251
    %v256 = vlaneseq
    %v257 = vshrl.u32 %v256, 7
    %v258 = vsub.s32 1, %v257
    %v259 = vrot.slane %v244, %v258
    %v260 = vlaneseq
    %v261 = vshrl.u32 %v260, 7
    %v262 = vsub.s32 1, %v261
    %v263 = vrot.slane %v248, %v262
    %v264 = vlaneseq
    %v265 = vshrl.u32 %v264, 7
    %v266 = vsub.s32 1, %v265
    %v267 = vrot.slane %v252, %v266
    %v268 = vsel %vm211, %v232, %v259
    %v269 = vsel %vm211, %v236, %v263
    %v270 = vsel %vm211, %v240, %v267
    %v271 = vsel %vm212, %v232, %v259
    %v272 = vsel %vm212, %v236, %v263
    %v273 = vsel %vm212, %v240, %v267
    %v274 = vld [vmem:[#allocation2] sm:$0xff]
    %v275 = vld [vmem:[#allocation2 + $0x8] sm:$0xff]
    %v276 = vld [vmem:[#allocation2 + $0x10] sm:$0xff]
    %v277 = vadd.f32 %v274, %v199
    %v278 = vadd.f32 %v275, %v200
    %v279 = vadd.f32 %v276, %v201
    %v280 = vadd.f32 %v274, %v202
    %v281 = vadd.f32 %v275, %v203
    %v282 = vadd.f32 %v276, %v204
    %v283 = vadd.f32 %v277, %v268
    %v284 = vadd.f32 %v278, %v269
    %v285 = vadd.f32 %v279, %v270
    %v286 = vadd.f32 %v280, %v271
    %v287 = vadd.f32 %v281, %v272
    %v288 = vadd.f32 %v282, %v273
    %v289 = vadd.f32 %v283, %v284
    %vm290 = vcmask 228352
    %v291 = vsel %vm290, %v285, 0.0
    %v292 = vadd.f32 %v289, %v291
    %293 = vadd.xlane.f32.xlu0 %v292
    %v294 = vpop.xlane.xlu0 %293
    %v295 = vadd.f32 %v286, %v287
    %v296 = vsel %vm290, %v288, 0.0
    %v297 = vadd.f32 %v295, %v296
    %298 = vadd.xlane.f32.xlu0 %v297
    %v299 = vpop.xlane.xlu0 %298
    %v300 = vrcp.pop 284.0
    %v301 = vmul.f32 %v294, %v300
    %v302 = vmul.f32 %v299, %v300
    %v303 = vsub.f32 %v283, %v301
    %v304 = vsub.f32 %v284, %v301
    %v305 = vsub.f32 %v285, %v301
    %v306 = vsub.f32 %v286, %v302
    %v307 = vsub.f32 %v287, %v302
    %v308 = vsub.f32 %v288, %v302
    %v309 = vmul.f32 %v303, %v303
    %v310 = vmul.f32 %v304, %v304
    %v311 = vmul.f32 %v305, %v305
    %v312 = vmul.f32 %v306, %v306
    %v313 = vmul.f32 %v307, %v307
    %v314 = vmul.f32 %v308, %v308
    %v315 = vadd.f32 %v309, %v310
    %v316 = vsel %vm290, %v311, 0.0
    %v317 = vadd.f32 %v315, %v316
    %318 = vadd.xlane.f32.xlu0 %v317
    %v319 = vpop.xlane.xlu0 %318
    %v320 = vadd.f32 %v312, %v313
    %v321 = vsel %vm290, %v314, 0.0
    %v322 = vadd.f32 %v320, %v321
    %323 = vadd.xlane.f32.xlu0 %v322
    %v324 = vpop.xlane.xlu0 %323
    %v325 = vmul.f32 %v319, %v300
    %v326 = vmul.f32 %v324, %v300
    %v327 = vadd.f32 %v325, 1e-05
    %v328 = vadd.f32 %v326, 1e-05
    %v329 = vrsqrt.pop %v327
    %v330 = vrsqrt.pop %v328
    %v331 = vmul.f32 %v303, %v329
    %v332 = vmul.f32 %v304, %v329
    %v333 = vmul.f32 %v305, %v329
    %v334 = vmul.f32 %v306, %v330
    %v335 = vmul.f32 %v307, %v330
    %v336 = vmul.f32 %v308, %v330
    %v337 = vld [vmem:[%s4] sm:$0x7]
    %v339 = vlaneseq
    %v340 = vshrl.u32 %v339, 7
    %v341 = vsub.s32 0, %v340
    %v342 = vrot.slane %v337, %v341
    %v343 = vlaneseq
    %v344 = vshrl.u32 %v343, 7
    %v345 = vsub.s32 1, %v344
    %v346 = vrot.slane %v337, %v345
    %v347 = vlaneseq
    %v348 = vshrl.u32 %v347, 7
    %v349 = vsub.s32 2, %v348
    %v350 = vrot.slane %v337, %v349
    %v354 = vmul.f32 %v331, %v342
    %v355 = vmul.f32 %v332, %v346
    %v356 = vmul.f32 %v333, %v350
    %v357 = vmul.f32 %v334, %v342
    %v358 = vmul.f32 %v335, %v346
    %v359 = vmul.f32 %v336, %v350
    %v360 = vld [vmem:[%s5] sm:$0x7]
    %v362 = vlaneseq
    %v363 = vshrl.u32 %v362, 7
    %v364 = vsub.s32 0, %v363
    %v365 = vrot.slane %v360, %v364
    %v366 = vlaneseq
    %v367 = vshrl.u32 %v366, 7
    %v368 = vsub.s32 1, %v367
    %v369 = vrot.slane %v360, %v368
    %v370 = vlaneseq
    %v371 = vshrl.u32 %v370, 7
    %v372 = vsub.s32 2, %v371
    %v373 = vrot.slane %v360, %v372
    %v377 = vadd.f32 %v354, %v365
    %v378 = vadd.f32 %v355, %v369
    %v379 = vadd.f32 %v356, %v373
    %v380 = vadd.f32 %v357, %v365
    %v381 = vadd.f32 %v358, %v369
    %v382 = vadd.f32 %v359, %v373
    %383 = vst [vmem:[#allocation5] sm:$0xff] %v377
    %384 = vst [vmem:[#allocation5 + $0x8] sm:$0xff] %v378
    %385 = vst.msk [vmem:[#allocation5 + $0x10] sm:$0xff] %vm290, %v379
    %386 = vst [vmem:[#allocation5 + $0x18] sm:$0xff] %v380
    %387 = vst [vmem:[#allocation5 + $0x20] sm:$0xff] %v381
    %388 = vst.msk [vmem:[#allocation5 + $0x28] sm:$0xff] %vm290, %v382
    // Predicated region
    $region30: #{tpu_custom_call.1} parent=1 // pred_check
      _
    $region31: #{tpu_custom_call.1} parent=1 // pred_check_branch
      %390 = sbr.rel (0) target = $region33
    $region32: #{tpu_custom_call.1} parent=1 // pred_region
      %s392 = ssub.s32 768, 768
      %393 = vsyncadd [#allocation4], %s392
      %s394 = sshll.u32 [#allocation5], 4
      %s395 = int_to_ptr.vmem [resolvable:$true] %s394
      %400 = dma.vmem_to_hbm [thread:$0]  %s395, 768, %s6, [#allocation4], 384, 384, 24
    $region33: #{tpu_custom_call.1} parent=1 // pred_fallthru
      _
    // Predicated region
    $region34: #{tpu_custom_call.1} parent=1 // pred_check
      _
    $region35: #{tpu_custom_call.1} parent=1 // pred_check_branch
      %402 = sbr.rel (0) target = $region37
    $region36: #{tpu_custom_call.1} parent=1 // pred_region
      %403 = dma.done [#allocation4], 768
    $region37: #{tpu_custom_call.1} parent=1 // pred_fallthru
      _
    %404 = vsyncpa [#allocation3], 1
    %405 = vsyncpa [#allocation4], 1

</llo_original>
